<compile_context>
chip_gen: v5e
topology: v5e:2x2
jax: 0.10.0
libtpu: 0.0.40
codegen_flags: <defaults>
</compile_context>

<pallas_src>
from typing import NamedTuple, Optional

import jax
import jax.numpy as jnp
from jax.experimental import pallas as pl
from jax.experimental.pallas import tpu as pltpu


class PCloud(NamedTuple):
    """Minimal JAX analogue of the reference PCloud container."""
    points: jax.Array    # (B, N, D) -- x, y, z, ...
    features: jax.Array  # (B, N, F)


_MAX_TILE_N = 128 * 1024                 # hard cap on points per lane tile
_LANE_MULTIPLE = 512                     # pad N to a multiple of this
_WORKING_SET_BUDGET = 24 * 1024 * 1024   # 2x in + 2x out pipelined buffers
_VMEM_LIMIT_BYTES = 48 * 1024 * 1024     # explicit: v5e default scoped limit is
                                         # 16 MiB; stays under v7x 64 MiB/TC


def _cdiv(a: int, b: int) -> int:
    return -(-a // b)


def _round_up(x: int, m: int) -> int:
    return _cdiv(x, m) * m


def _pad_and_tile(n: int, c: int, itemsize: int,
                  max_tile_n: Optional[int] = None):
    """(padded_n, tile_n): tile_n | padded_n, tile_n % 512 == 0, waste < 512*n_tiles."""
    c_pad = _round_up(max(c, 1), 8)            # sublane padding inside VMEM
    per_lane_col = 4 * c_pad * itemsize        # 2x input + 2x output buffers
    cap = (_WORKING_SET_BUDGET // per_lane_col) // _LANE_MULTIPLE * _LANE_MULTIPLE
    cap = max(cap, _LANE_MULTIPLE)
    max_tile = _MAX_TILE_N if max_tile_n is None else max_tile_n
    max_tile = max(_round_up(min(max_tile, cap), _LANE_MULTIPLE), _LANE_MULTIPLE)

    n512 = _round_up(n, _LANE_MULTIPLE)
    if n512 <= max_tile:
        return n512, n512
    n_tiles = _cdiv(n512, max_tile)
    tile_n = _round_up(_cdiv(n512, n_tiles), _LANE_MULTIPLE)
    return tile_n * n_tiles, tile_n


# --------------------------------------------------------------------------
# Fused kernel: phase 0 = x/y bounds reduction, phase 1 = NaN crop mask.
# --------------------------------------------------------------------------
def _center_z_kernel(ratio_ref, slab_ref, out_ref, bmin_ref, bmax_ref):
    phase = pl.program_id(0)
    tile = pl.program_id(1)

    @pl.when((phase == 0) & (tile == 0))
    def _init():
        bmin_ref[...] = jnp.full(bmin_ref.shape, jnp.inf, dtype=jnp.float32)
        bmax_ref[...] = jnp.full(bmax_ref.shape, -jnp.inf, dtype=jnp.float32)

    @pl.when(phase == 0)
    def _bounds():
        xy = slab_ref[0:2, :].astype(jnp.float32)                 # (2, TILE_N)
        bmin_ref[...] = jnp.minimum(bmin_ref[...],
                                    jnp.min(xy, axis=1, keepdims=True))
        bmax_ref[...] = jnp.maximum(bmax_ref[...],
                                    jnp.max(xy, axis=1, keepdims=True))

    @pl.when(phase == 1)
    def _crop():
        bmin = bmin_ref[...]                                      # (2, 1)
        bmax = bmax_ref[...]                                      # (2, 1)
        size = (bmax - bmin) * ratio_ref[...]                     # (2, 1)
        lo = (bmin + bmax) * 0.5 - size * 0.5
        hi = lo + size
        slab = slab_ref[...]                                      # (C, TILE_N)
        xy = slab[0:2, :].astype(jnp.float32)
        ins = (xy > lo) & (xy < hi)                               # (2, TILE_N)
        inside = ins[0:1, :] & ins[1:2, :]                        # (1, TILE_N)
        out_ref[...] = jnp.where(inside, jnp.nan, slab)


def _center_z_call(ratio: jax.Array, slab: jax.Array, tile_n: int) -> jax.Array:
    c, n_pad = slab.shape
    n_tiles = n_pad // tile_n
    itemsize = jnp.dtype(slab.dtype).itemsize

    return pl.pallas_call(
        _center_z_kernel,
        out_shape=jax.ShapeDtypeStruct((c, n_pad), slab.dtype),
        grid_spec=pltpu.PrefetchScalarGridSpec(
            num_scalar_prefetch=0,
            grid=(2, n_tiles),
            in_specs=[
                pl.BlockSpec((1, 1), lambda p, t: (0, 0)),        # ratio: fetched once
                pl.BlockSpec((c, tile_n), lambda p, t: (0, t)),   # slab tiles
            ],
            out_specs=pl.BlockSpec(
                # Pinned to block 0 during the bounds phase so no uninitialized
                # output block is ever written back; phase 1 walks tiles normally.
                (c, tile_n), lambda p, t: (0, jnp.where(p == 0, 0, t))),
            scratch_shapes=[pltpu.VMEM((2, 1), jnp.float32),      # running min (x, y)
                            pltpu.VMEM((2, 1), jnp.float32)],     # running max (x, y)
        ),
        compiler_params=pltpu.CompilerParams(
            dimension_semantics=("arbitrary", "arbitrary"),       # sequential phases
            vmem_limit_bytes=_VMEM_LIMIT_BYTES,
        ),
        cost_estimate=pl.CostEstimate(
            flops=(c + 12) * n_pad,
            transcendentals=0,
            bytes_accessed=3 * c * n_pad * itemsize + 4,
        ),
    )(ratio, slab)


# --------------------------------------------------------------------------
# Forward (mirrors CenterZRandom.forward)
# --------------------------------------------------------------------------
def center_z_random_forward(pcloud: PCloud, key: jax.Array,
                            max_tile_n: Optional[int] = None) -> PCloud:
    points, features = pcloud.points, pcloud.features
    B, N, D = points.shape
    F = features.shape[-1]

    if B > 1:
        # Reference semantics: batched input is returned untouched (no kernel).
        return pcloud

    slab_dtype = jnp.promote_types(points.dtype, features.dtype)
    # Single fused channel-major slab: rows [x, y, z..., f0...]; points on lanes.
    slab = jnp.concatenate([points[0].astype(slab_dtype),
                            features[0].astype(slab_dtype)], axis=1).T   # (C, N)
    C = D + F

    n_pad, tile_n = _pad_and_tile(N, C, jnp.dtype(slab_dtype).itemsize, max_tile_n)
    if n_pad != N:
        # Edge replication keeps min/max unchanged.  Padded columns may get
        # NaN'd in phase 1 -- harmless, they are sliced away below, so keep [:N].
        slab = jnp.pad(slab, ((0, 0), (0, n_pad - N)), mode="edge")

    # Mirrors `0.5 * torch.rand(BATCH_SIZE)` (distributional parity; JAX PRNG).
    ratio = (0.5 * jax.random.uniform(key, (1,), dtype=jnp.float32)).reshape(1, 1)

    out_slab = _center_z_call(ratio, slab, tile_n)

    # Single slice + transpose back to (N, C), split into points / features.
    # TODO(synk): if the downstream consumer accepts channel-major clouds,
    # return out_slab[:, :N] directly and drop this transpose entirely.
    out_nc = jnp.transpose(out_slab[:, :N], (1, 0))
    pts_o = out_nc[:, :D].astype(points.dtype)[None]
    feat_o = out_nc[:, D:].astype(features.dtype)[None]
    return PCloud(points=pts_o, features=feat_o)


class CenterZRandomPallas:
    """JAX/Pallas analogue of CenterZRandom(TF)."""

    def __init__(self, base_ratio: float, key=None) -> None:
        if key is None:
            key = jax.random.PRNGKey(0)
        # Mirrors `self.ratio = base_ratio * torch.rand(1).item()`.
        # NOTE: like the reference, `ratio` is NOT used by forward (forward
        # draws a fresh 0.5 * U[0,1) ratio per call).
        self.ratio = float(base_ratio * jax.random.uniform(key, (), dtype=jnp.float32))

    def __repr__(self) -> str:
        return f"CenterZRandom(ratio={self.ratio:0.4f})"

    def __call__(self, pcloud: PCloud, key: jax.Array) -> PCloud:
        return center_z_random_forward(pcloud, key)


# --------------------------------------------------------------------------
# Pure-jnp reference (for validation) and self-test
# --------------------------------------------------------------------------
def _reference_forward(pcloud: PCloud, key: jax.Array) -> PCloud:
    points, features = pcloud.points, pcloud.features
    if points.shape[0] > 1:
        return pcloud
    ratio = (0.5 * jax.random.uniform(key, (1,), dtype=jnp.float32))[0]
    x = points[0, :, 0].astype(jnp.float32)
    y = points[0, :, 1].astype(jnp.float32)
    min_x, max_x = jnp.min(x), jnp.max(x)
    min_y, max_y = jnp.min(y), jnp.max(y)
    size_x = (max_x - min_x) * ratio
    size_y = (max_y - min_y) * ratio
    start_x = (min_x + max_x) / 2 - size_x / 2
    start_y = (min_y + max_y) / 2 - size_y / 2
    mask = ((x > start_x) & (x < start_x + size_x) &
            (y > start_y) & (y < start_y + size_y))
    m = mask[None, :, None]
    return PCloud(points=jnp.where(m, jnp.nan, points),
                  features=jnp.where(m, jnp.nan, features))


if __name__ == "__main__":
    key = jax.random.PRNGKey(0)
    k_pts, k_feat, k_init, k_fwd, k_fwd2 = jax.random.split(key, 5)

    # batch=1 (transform only fires for B==1), 1000 points, xyz + 4 features.
    B, N, D, F = 1, 1000, 3, 4
    points = jax.random.normal(k_pts, (B, N, D), dtype=jnp.float32)
    features = jax.random.normal(k_feat, (B, N, F), dtype=jnp.float32)
    pcloud = PCloud(points=points, features=features)

    tf = CenterZRandomPallas(base_ratio=0.5, key=k_init)
    forward = jax.jit(tf.__call__)
    out = jax.block_until_ready(forward(pcloud, k_fwd))
    ref = _reference_forward(pcloud, k_fwd)

    assert out.points.shape == points.shape and out.points.dtype == points.dtype
    assert out.features.shape == features.shape and out.features.dtype == features.dtype
    assert bool(jnp.array_equal(jnp.isnan(out.points), jnp.isnan(ref.points)))
    assert bool(jnp.array_equal(jnp.isnan(out.features), jnp.isnan(ref.features)))
    assert bool(jnp.allclose(out.points, ref.points, equal_nan=True))
    assert bool(jnp.allclose(out.features, ref.features, equal_nan=True))

    # Multi-tile path: force small tiles so the 2-phase pipeline spans 4 tiles.
    N2 = 1600
    pts2 = jax.random.normal(k_pts, (1, N2, D), dtype=jnp.float32)
    feat2 = jax.random.normal(k_feat, (1, N2, F), dtype=jnp.float32)
    pc2 = PCloud(points=pts2, features=feat2)
    fwd_tiled = jax.jit(lambda pc, k: center_z_random_forward(pc, k, max_tile_n=512))
    out2 = jax.block_until_ready(fwd_tiled(pc2, k_fwd2))
    ref2 = _reference_forward(pc2, k_fwd2)
    assert bool(jnp.array_equal(jnp.isnan(out2.points), jnp.isnan(ref2.points)))
    assert bool(jnp.allclose(out2.points, ref2.points, equal_nan=True))
    assert bool(jnp.allclose(out2.features, ref2.features, equal_nan=True))

    # Batched input is returned untouched (reference semantics, no kernel).
    pc_b = PCloud(points=jnp.concatenate([points, points], axis=0),
                  features=jnp.concatenate([features, features], axis=0))
    out_b = center_z_random_forward(pc_b, k_fwd)
    assert out_b.points is pc_b.points and out_b.features is pc_b.features

    print("KERNEL_OK")
</pallas_src>

<mosaic_0001>
module attributes {stable_mosaic.version = 11 : i64} {
  func.func @_center_z_kernel(%arg0: i32, %arg1: i32, %arg2: memref<1x1xf32, #tpu.memory_space<vmem>>, %arg3: memref<7x1024xf32, #tpu.memory_space<vmem>>, %arg4: memref<7x1024xf32, #tpu.memory_space<vmem>>, %arg5: memref<2x1xf32, #tpu.memory_space<vmem>>, %arg6: memref<2x1xf32, #tpu.memory_space<vmem>>) attributes {dimension_semantics = [#tpu.dimension_semantics<arbitrary>, #tpu.dimension_semantics<arbitrary>], iteration_bounds = array<i64: 2, 1>, scalar_prefetch = 0 : i64, scratch_operands = 2 : i64, tpu.core_type = #tpu.core_type<tc>, window_params = [{pipeline_mode = #tpu.pipeline_mode<synchronous>, transform_indices = @transform_0, window_bounds = array<i64: 1, 1>}, {transform_indices = @transform_1, window_bounds = array<i64: 7, 1024>}, {transform_indices = @transform_2, window_bounds = array<i64: 7, 1024>}]} {
    %c0_i32 = arith.constant 0 : i32
    %0 = arith.cmpi eq, %arg0, %c0_i32 : i32
    %c0_i32_0 = arith.constant 0 : i32
    %1 = arith.cmpi eq, %arg1, %c0_i32_0 : i32
    %2 = arith.andi %0, %1 : i1
    %3 = arith.extui %2 : i1 to i32
    %c0_i32_1 = arith.constant 0 : i32
    %4 = arith.cmpi ne, %3, %c0_i32_1 : i32
    scf.if %4 {
      %cst = arith.constant 0x7F800000 : f32
      %11 = vector.broadcast %cst : f32 to vector<2x1xf32>
      %c0 = arith.constant 0 : index
      %c0_5 = arith.constant 0 : index
      %12 = vector.load %arg5[%c0, %c0_5] : memref<2x1xf32, #tpu.memory_space<vmem>>, vector<2x1xf32>
      tpu.vector_store %arg5[%c0, %c0_5], %11 {strides = array<i32>} : memref<2x1xf32, #tpu.memory_space<vmem>>, vector<2x1xf32>,
      %cst_6 = arith.constant 0xFF800000 : f32
      %13 = vector.broadcast %cst_6 : f32 to vector<2x1xf32>
      %c0_7 = arith.constant 0 : index
      %c0_8 = arith.constant 0 : index
      %14 = vector.load %arg6[%c0_7, %c0_8] : memref<2x1xf32, #tpu.memory_space<vmem>>, vector<2x1xf32>
      tpu.vector_store %arg6[%c0_7, %c0_8], %13 {strides = array<i32>} : memref<2x1xf32, #tpu.memory_space<vmem>>, vector<2x1xf32>,
    } else {
    }
    %c0_i32_2 = arith.constant 0 : i32
    %5 = arith.cmpi eq, %arg0, %c0_i32_2 : i32
    %6 = arith.extui %5 : i1 to i32
    %c0_i32_3 = arith.constant 0 : i32
    %7 = arith.cmpi ne, %6, %c0_i32_3 : i32
    scf.if %7 {
      %c0 = arith.constant 0 : index
      %c0_5 = arith.constant 0 : index
      %11 = vector.load %arg3[%c0, %c0_5] : memref<7x1024xf32, #tpu.memory_space<vmem>>, vector<2x1024xf32>
      %c0_6 = arith.constant 0 : index
      %c0_7 = arith.constant 0 : index
      %12 = vector.load %arg5[%c0_6, %c0_7] : memref<2x1xf32, #tpu.memory_space<vmem>>, vector<2x1xf32>
      %cst = arith.constant dense<0x7F800000> : vector<2xf32>
      %13 = vector.multi_reduction <minimumf>, %11, %cst [1] : vector<2x1024xf32> to vector<2xf32>
      %14 = vector.shape_cast %13 : vector<2xf32> to vector<2x1xf32>
      %15 = arith.minimumf %12, %14 : vector<2x1xf32>
      %c0_8 = arith.constant 0 : index
      %c0_9 = arith.constant 0 : index
      %16 = vector.load %arg5[%c0_8, %c0_9] : memref<2x1xf32, #tpu.memory_space<vmem>>, vector<2x1xf32>
      tpu.vector_store %arg5[%c0_8, %c0_9], %15 {strides = array<i32>} : memref<2x1xf32, #tpu.memory_space<vmem>>, vector<2x1xf32>,
      %c0_10 = arith.constant 0 : index
      %c0_11 = arith.constant 0 : index
      %17 = vector.load %arg6[%c0_10, %c0_11] : memref<2x1xf32, #tpu.memory_space<vmem>>, vector<2x1xf32>
      %cst_12 = arith.constant dense<0xFF800000> : vector<2xf32>
      %18 = vector.multi_reduction <maximumf>, %11, %cst_12 [1] : vector<2x1024xf32> to vector<2xf32>
      %19 = vector.shape_cast %18 : vector<2xf32> to vector<2x1xf32>
      %20 = arith.maximumf %17, %19 : vector<2x1xf32>
      %c0_13 = arith.constant 0 : index
      %c0_14 = arith.constant 0 : index
      %21 = vector.load %arg6[%c0_13, %c0_14] : memref<2x1xf32, #tpu.memory_space<vmem>>, vector<2x1xf32>
      tpu.vector_store %arg6[%c0_13, %c0_14], %20 {strides = array<i32>} : memref<2x1xf32, #tpu.memory_space<vmem>>, vector<2x1xf32>,
    } else {
    }
    %c1_i32 = arith.constant 1 : i32
    %8 = arith.cmpi eq, %arg0, %c1_i32 : i32
    %9 = arith.extui %8 : i1 to i32
    %c0_i32_4 = arith.constant 0 : i32
    %10 = arith.cmpi ne, %9, %c0_i32_4 : i32
    scf.if %10 {
      %c0 = arith.constant 0 : index
      %c0_5 = arith.constant 0 : index
      %11 = vector.load %arg5[%c0, %c0_5] : memref<2x1xf32, #tpu.memory_space<vmem>>, vector<2x1xf32>
      %c0_6 = arith.constant 0 : index
      %c0_7 = arith.constant 0 : index
      %12 = vector.load %arg6[%c0_6, %c0_7] : memref<2x1xf32, #tpu.memory_space<vmem>>, vector<2x1xf32>
      %13 = arith.subf %12, %11 : vector<2x1xf32>
      %c0_8 = arith.constant 0 : index
      %c0_9 = arith.constant 0 : index
      %14 = vector.load %arg2[%c0_8, %c0_9] : memref<1x1xf32, #tpu.memory_space<vmem>>, vector<1x1xf32>
      %15 = vector.broadcast %14 : vector<1x1xf32> to vector<2x1xf32>
      %16 = arith.mulf %13, %15 : vector<2x1xf32>
      %17 = arith.addf %11, %12 : vector<2x1xf32>
      %cst = arith.constant 5.000000e-01 : f32
      %18 = vector.broadcast %cst : f32 to vector<2x1xf32>
      %19 = arith.mulf %17, %18 : vector<2x1xf32>
      %cst_10 = arith.constant 5.000000e-01 : f32
      %20 = vector.broadcast %cst_10 : f32 to vector<2x1xf32>
      %21 = arith.mulf %16, %20 : vector<2x1xf32>
      %22 = arith.subf %19, %21 : vector<2x1xf32>
      %23 = arith.addf %22, %16 : vector<2x1xf32>
      %c0_11 = arith.constant 0 : index
      %c0_12 = arith.constant 0 : index
      %24 = vector.load %arg3[%c0_11, %c0_12] : memref<7x1024xf32, #tpu.memory_space<vmem>>, vector<7x1024xf32>
      %25 = vector.extract_strided_slice %24 {offsets = [0, 0], sizes = [2, 1024], strides = [1, 1]} : vector<7x1024xf32> to vector<2x1024xf32>
      %26 = vector.broadcast %22 : vector<2x1xf32> to vector<2x1024xf32>
      %27 = arith.cmpf ogt, %25, %26 : vector<2x1024xf32>
      %28 = vector.broadcast %23 : vector<2x1xf32> to vector<2x1024xf32>
      %29 = arith.cmpf olt, %25, %28 : vector<2x1024xf32>
      %30 = arith.andi %27, %29 : vector<2x1024xi1>
      %31 = vector.extract_strided_slice %30 {offsets = [0, 0], sizes = [1, 1024], strides = [1, 1]} : vector<2x1024xi1> to vector<1x1024xi1>
      %32 = vector.extract_strided_slice %30 {offsets = [1, 0], sizes = [1, 1024], strides = [1, 1]} : vector<2x1024xi1> to vector<1x1024xi1>
      %33 = arith.andi %31, %32 : vector<1x1024xi1>
      %cst_13 = arith.constant 0x7FC00000 : f32
      %34 = vector.shape_cast %33 : vector<1x1024xi1> to vector<1x1024xi1>
      %35 = vector.broadcast %34 : vector<1x1024xi1> to vector<7x1024xi1>
      %36 = vector.broadcast %cst_13 : f32 to vector<7x1024xf32>
      %37 = arith.select %35, %36, %24 : vector<7x1024xi1>, vector<7x1024xf32>
      %c0_14 = arith.constant 0 : index
      %c0_15 = arith.constant 0 : index
      %38 = vector.load %arg4[%c0_14, %c0_15] : memref<7x1024xf32, #tpu.memory_space<vmem>>, vector<7x1024xf32>
      tpu.vector_store %arg4[%c0_14, %c0_15], %37 {strides = array<i32>} : memref<7x1024xf32, #tpu.memory_space<vmem>>, vector<7x1024xf32>,
    } else {
    }
    return
  }
  func.func @transform_0(%arg0: i32, %arg1: i32) -> (i32, i32) {
    %c0_i32 = arith.constant 0 : i32
    %c0_i32_0 = arith.constant 0 : i32
    %c0_i32_1 = arith.constant 0 : i32
    return %c0_i32, %c0_i32_0 : i32, i32
  }
  func.func @transform_1(%arg0: i32, %arg1: i32) -> (i32, i32) {
    %c0_i32 = arith.constant 0 : i32
    %c0_i32_0 = arith.constant 0 : i32
    return %c0_i32, %arg1 : i32, i32
  }
  func.func @transform_2(%arg0: i32, %arg1: i32) -> (i32, i32) {
    %c0_i32 = arith.constant 0 : i32
    %0 = arith.cmpi eq, %arg0, %c0_i32 : i32
    %c0_i32_0 = arith.constant 0 : i32
    %1 = arith.select %0, %c0_i32_0, %arg1 : i32
    %c0_i32_1 = arith.constant 0 : i32
    %c0_i32_2 = arith.constant 0 : i32
    return %c0_i32_1, %1 : i32, i32
  }
}

</mosaic_0001>

<llo_original>
// kernel: a_call__.1
$region0: #{a_call__.1}
  #allocation0 [shape = 'u32[]', space=smem, size = 0x4, offset = 0x4, fixed_abs, tag = 'smem constant byte address 0x4 - core index']
  #allocation1 [shape = 'u32[72,128]{1,0:T(1,128)}', space=vmem, size = 0x9000, scoped, tag = 'internal scratch']
  #allocation2 [shape = 'f32[2,1]{1,0:T(2,128)}', space=vmem, size = 0x400, scoped, tag = 'scratch operand']
  #allocation3 [shape = 'f32[2,1]{1,0:T(2,128)}', space=vmem, size = 0x400, scoped, tag = 'scratch operand']
  #allocation4 [shape = 'f32[1,1]{1,0:T(1,128)S(1)}', space=vmem, size = 0x200, scoped, tag = 'scoped memory for a_call__.1']
  %s0 = inlined_call_operand.<no memory space> [shape: f32[1,1], index: 0, kind: input, shape index: {}]
  %s1 = inlined_call_operand.vmem [shape: f32[7,1024], index: 1, kind: input, shape index: {}]
  %s2 = inlined_call_operand.vmem [shape: f32[7,1024], index: 2, kind: output, shape index: {}]
  %s3 = sld [smem:[#allocation0]]
  $region53: #{a_call__.1} parent=0
    _
  %s5 = ssub.s32 1, %s3
  %s6 = scalar_select 0, %s5, %s3
  %v7 = vstv %s0
  %8 = vst [vmem:[#allocation4] sm:$0x1] %v7
  loop: start=0, step=1, limit=4
  $region2: #{a_call__.1} parent=0 // loop_pre_header
    _
  $region3: #{a_call__.1} parent=0 // loop_header
    %s10 = sphi 0, %s14
    %p11 = scmp.ge.s32.totalorder %s10, 4
    %s17 = sphi 0, %s29
    %s18 = sphi 0, %s25
    %s19 = sphi 0, %s17
    %s20 = sphi 0, %s18
    %s21 = sphi 0, %s19
    %s22 = sphi 0, %s20
    %s30 = sphi 0, %s30
    %s32 = sphi 0, %s30
    %s33 = sphi 0, %s32
    %s47 = sphi 0, %s33
    %s53 = sphi 0, %s55
    %s56 = sphi 0, %s53
    %s57 = sphi 0, %s56
    %s73 = sphi 0, %s57
    %s83 = sphi 0, %s85
    %s86 = sphi 0, %s83
    %s87 = sphi 0, %s86
    %s103 = sphi 0, %s87
  $region4: #{a_call__.1} parent=0 // loop_header_branch
    %13 = sbr.rel (%p11) target = $region8
  $region5: #{a_call__.1} parent=0 // loop_body
    %s15 = ssub.s32 %s10, 1
    %s16 = ssub.s32 %s10, 2
    %s23 = sadd.s32 1, %s18
    %p24 = scmp.ge.s32.totalorder %s23, 1
    %s25 = scalar_select %p24, 0, %s23
    %s26 = sadd.s32 1, %s17
    %s27 = scalar_select %p24, %s26, %s17
    %p28 = scmp.ge.s32.totalorder %s27, 2
    %s29 = scalar_select %p28, 0, %s27
    %s31 = sadd.s32 %s30, 1
    %p34 = scmp.eq.s32.totalorder %s10, 1
    %p35 = scmp.ne.s32.totalorder %s30, %s32
    %p36 = scmp.eq.s32.totalorder %s10, 0
    %p37 = por %p35, %p36
    %p38 = scmp.ne.s32.totalorder %s30, %s32
    %p39 = scmp.eq.s32.totalorder %s15, 1
    %p40 = por %p38, %p39
    %p41 = scmp.ne.s32.totalorder %s32, %s33
    %p42 = scmp.eq.s32.totalorder %s15, 0
    %p43 = por %p41, %p42
    %p44 = scmp.ne.s32.totalorder %s32, %s33
    %p45 = scmp.eq.s32.totalorder %s16, 1
    %p46 = por %p44, %p45
    %p48 = scmp.ne.s32.totalorder %s33, %s47
    %p49 = scmp.eq.s32.totalorder %s16, 0
    %p50 = por %p48, %p49
    %s51 = ssub.s32 %s18, %s25
    %p52 = scmp.eq.s32.totalorder %s51, 0
    %s54 = sadd.s32 %s53, 1
    %s55 = scalar_select %p52, %s53, %s54
    %p58 = pneg %p52
    %p59 = scmp.eq.s32.totalorder %s10, 1
    %p60 = por %p58, %p59
    %p61 = scmp.ne.s32.totalorder %s53, %s56
    %p62 = scmp.eq.s32.totalorder %s10, 0
    %p63 = por %p61, %p62
    %p64 = scmp.ne.s32.totalorder %s53, %s56
    %p65 = scmp.eq.s32.totalorder %s15, 1
    %p66 = por %p64, %p65
    %p67 = scmp.ne.s32.totalorder %s56, %s57
    %p68 = scmp.eq.s32.totalorder %s15, 0
    %p69 = por %p67, %p68
    %p70 = scmp.ne.s32.totalorder %s56, %s57
    %p71 = scmp.eq.s32.totalorder %s16, 1
    %p72 = por %p70, %p71
    %p74 = scmp.ne.s32.totalorder %s57, %s73
    %p75 = scmp.eq.s32.totalorder %s16, 0
    %p76 = por %p74, %p75
    %p77 = scmp.eq.s32.totalorder %s17, 0
    %s78 = scalar_select %p77, 0, %s18
    %p79 = scmp.eq.s32.totalorder %s29, 0
    %s80 = scalar_select %p79, 0, %s25
    %s81 = ssub.s32 %s78, %s80
    %p82 = scmp.eq.s32.totalorder %s81, 0
    %s84 = sadd.s32 %s83, 1
    %s85 = scalar_select %p82, %s83, %s84
    %p88 = pneg %p82
    %p89 = scmp.eq.s32.totalorder %s10, 1
    %p90 = por %p88, %p89
    %p91 = scmp.ne.s32.totalorder %s83, %s86
    %p92 = scmp.eq.s32.totalorder %s10, 0
    %p93 = por %p91, %p92
    %p94 = scmp.ne.s32.totalorder %s83, %s86
    %p95 = scmp.eq.s32.totalorder %s15, 1
    %p96 = por %p94, %p95
    %p97 = scmp.ne.s32.totalorder %s86, %s87
    %p98 = scmp.eq.s32.totalorder %s15, 0
    %p99 = por %p97, %p98
    %p100 = scmp.ne.s32.totalorder %s86, %s87
    %p101 = scmp.eq.s32.totalorder %s16, 1
    %p102 = por %p100, %p101
    %p104 = scmp.ne.s32.totalorder %s87, %s103
    %p105 = scmp.eq.s32.totalorder %s16, 0
    %p106 = por %p104, %p105
    %p107 = scmp.le.s32.totalorder 1, %s10
    %p108 = scmp.lt.s32.totalorder %s10, 3
    %p109 = pnand %p107, %p108
    %p110 = pneg %p109
    // Predicated region
    $region9: #{a_call__.1} parent=5 // pred_check
      _
    $region10: #{a_call__.1} parent=5 // pred_check_branch
      %112 = sbr.rel (%p109) target = $region12
    $region11: #{a_call__.1} parent=5 // pred_region
      %s113 = ssub.s32 %s10, 1
      // Predicated region
      $region13: #{a_call__.1} parent=11 // pred_check
        %p114 = pneg %p43
      $region14: #{a_call__.1} parent=11 // pred_check_branch
        %116 = sbr.rel (%p114) target = $region16
      $region15: #{a_call__.1} parent=11 // pred_region
        _
      $region16: #{a_call__.1} parent=11 // pred_fallthru
        _
      // Predicated region
      $region17: #{a_call__.1} parent=11 // pred_check
        %p117 = pneg %p69
      $region18: #{a_call__.1} parent=11 // pred_check_branch
        %119 = sbr.rel (%p117) target = $region20
      $region19: #{a_call__.1} parent=11 // pred_region
        %s120 = smul.u32 8, %s20
        %p121 = scmp.lt.s32.totalorder %s120, 7
        %s122 = scalar_select %p121, %s120, 7
        %s123 = smul.addr %s122, 8
        %s124 = scalar_lea.vmem %s1, %s123
        %s125 = smul.u32 8, %s20
      $region20: #{a_call__.1} parent=11 // pred_fallthru
        _
    $region12: #{a_call__.1} parent=5 // pred_fallthru
      _
    %p126 = scmp.lt.s32.totalorder %s10, 2
    // Predicated region
    $region21: #{a_call__.1} parent=5 // pred_check
      %p127 = pneg %p126
    $region22: #{a_call__.1} parent=5 // pred_check_branch
      %129 = sbr.rel (%p127) target = $region24
    $region23: #{a_call__.1} parent=5 // pred_region
      _
    $region24: #{a_call__.1} parent=5 // pred_fallthru
      _
    %p130 = scmp.le.s32.totalorder 1, %s10
    %p131 = scmp.lt.s32.totalorder %s10, 3
    %p132 = pnand %p130, %p131
    %p133 = pneg %p132
    // Predicated region
    $region25: #{a_call__.1} parent=5 // pred_check
      _
    $region26: #{a_call__.1} parent=5 // pred_check_branch
      %135 = sbr.rel (%p132) target = $region28
    $region27: #{a_call__.1} parent=5 // pred_region
      %s136 = ssub.s32 %s10, 1
      %p137 = pneg %p43
      %p138 = pneg %p40
      %s139 = smul.u32 8, %s20
      %p140 = scmp.lt.s32.totalorder %s139, 7
      %s141 = scalar_select %p140, %s139, 7
      %s142 = smul.addr %s141, 8
      %s143 = scalar_lea.vmem %s1, %s142
      %p144 = pneg %p69
      %p145 = pneg %p66
      %p146 = pneg %p99
      %p147 = pneg %p96
      %p148 = scmp.eq.s32.totalorder %s19, 0
      %s149 = scalar_select %p148, 0, %s20
      %s150 = smul.u32 8, %s149
      %p151 = scmp.lt.s32.totalorder %s150, 7
      %s152 = scalar_select %p151, %s150, 7
      %s153 = smul.addr %s152, 8
      %s154 = scalar_lea.vmem %s2, %s153
      %s155 = smul.u32 8, %s20
      %p156 = scmp.lt.s32.totalorder %s155, 7
      %s157 = scalar_select %p156, %s155, 7
      %s158 = smul.addr %s157, 8
      %s159 = scalar_lea.vmem %s1, %s158
      %s160 = smul.u32 8, %s20
      %p161 = scmp.eq.s32.totalorder %s19, 0
      %s162 = scalar_select %p161, 0, %s20
      %s163 = smul.u32 8, %s162
      %p164 = scmp.lt.s32.totalorder %s163, 7
      %s165 = scalar_select %p164, %s163, 7
      %s166 = smul.addr %s165, 8
      %s167 = scalar_lea.vmem %s2, %s166
      %p168 = scmp.eq.s32.totalorder %s19, 0
      %s169 = scalar_select %p168, 0, %s20
      %s170 = smul.u32 8, %s169
      %p171 = scmp.eq.s32.totalorder %s19, 0
      %p172 = scmp.eq.s32.totalorder %s20, 0
      %p173 = pnand %p171, %p172
      %p174 = pneg %p173
      // Predicated region
      $region29: #{a_call__.1} parent=27 // pred_check
        _
      $region30: #{a_call__.1} parent=27 // pred_check_branch
        %176 = sbr.rel (%p173) target = $region32
      $region31: #{a_call__.1} parent=27 // pred_region
        %vm177 = vcmask 1024
        %178 = vst.msk [vmem:[#allocation2] sm:$0x3] %vm177, inf
        %179 = vst.msk [vmem:[#allocation3] sm:$0x3] %vm177, -inf
      $region32: #{a_call__.1} parent=27 // pred_fallthru
        _
      // Predicated region
      $region33: #{a_call__.1} parent=27 // pred_check
        %p180 = pneg %p171
      $region34: #{a_call__.1} parent=27 // pred_check_branch
        %182 = sbr.rel (%p180) target = $region36
      $region35: #{a_call__.1} parent=27 // pred_region
        %v183 = vld [vmem:[%s159] sm:$0x3]
        %v184 = vld [vmem:[%s159 + $0x8] sm:$0x3]
        %v185 = vld [vmem:[%s159 + $0x10] sm:$0x3]
        %v186 = vld [vmem:[%s159 + $0x18] sm:$0x3]
        %v187 = vld [vmem:[%s159 + $0x20] sm:$0x3]
        %v188 = vld [vmem:[%s159 + $0x28] sm:$0x3]
        %v189 = vld [vmem:[%s159 + $0x30] sm:$0x3]
        %v190 = vld [vmem:[%s159 + $0x38] sm:$0x3]
        %v191 = vld [vmem:[#allocation2] sm:$0x3]
        %vm192 = vcmask 1041408
        %v193 = vsel %vm192, %v183, inf
        %v194 = vsel %vm192, %v184, inf
        %v195 = vsel %vm192, %v185, inf
        %v196 = vsel %vm192, %v186, inf
        %v197 = vsel %vm192, %v187, inf
        %v198 = vmin.f32 %v193, %v197
        %v199 = vsel %vm192, %v188, inf
        %v200 = vmin.f32 %v194, %v199
        %v201 = vsel %vm192, %v189, inf
        %v202 = vmin.f32 %v195, %v201
        %v203 = vsel %vm192, %v190, inf
        %v204 = vmin.f32 %v196, %v203
        %v205 = vmin.f32 %v198, %v200
        %v206 = vmin.f32 %v202, %v204
        %v207 = vmin.f32 %v205, %v206
        %208 = vmin.xlane.f32.xlu0 %v207
        %v209 = vpop.xlane.xlu0 %208
        %v210 = vmin.f32 %v191, %v209
        %vm211 = vcmask 1024
        %212 = vst.msk [vmem:[#allocation2] sm:$0x3] %vm211, %v210
        %v213 = vld [vmem:[#allocation3] sm:$0x3]
        %v214 = vsel %vm192, %v183, -inf
        %v215 = vsel %vm192, %v184, -inf
        %v216 = vsel %vm192, %v185, -inf
        %v217 = vsel %vm192, %v186, -inf
        %v218 = vsel %vm192, %v187, -inf
        %v219 = vmax.f32 %v214, %v218
        %v220 = vsel %vm192, %v188, -inf
        %v221 = vmax.f32 %v215, %v220
        %v222 = vsel %vm192, %v189, -inf
        %v223 = vmax.f32 %v216, %v222
        %v224 = vsel %vm192, %v190, -inf
        %v225 = vmax.f32 %v217, %v224
        %v226 = vmax.f32 %v219, %v221
        %v227 = vmax.f32 %v223, %v225
        %v228 = vmax.f32 %v226, %v227
        %229 = vmax.xlane.f32.xlu0 %v228
        %v230 = vpop.xlane.xlu0 %229
        %v231 = vmax.f32 %v213, %v230
        %232 = vst.msk [vmem:[#allocation3] sm:$0x3] %vm211, %v231
      $region36: #{a_call__.1} parent=27 // pred_fallthru
        _
      %p233 = scmp.eq.s32.totalorder %s19, 1
      // Predicated region
      $region37: #{a_call__.1} parent=27 // pred_check
        %p234 = pneg %p233
      $region38: #{a_call__.1} parent=27 // pred_check_branch
        %236 = sbr.rel (%p234) target = $region40
      $region39: #{a_call__.1} parent=27 // pred_region
        %v237 = vld [vmem:[#allocation2] sm:$0x3]
        %v238 = vld [vmem:[#allocation3] sm:$0x3]
        %v239 = vsub.f32 %v238, %v237
        %v240 = vld [vmem:[#allocation4] sm:$0x1]
        %v242 = vperm.slane %v240, 0
        %v244 = vmul.f32 %v239, %v242
        %v245 = vadd.f32 %v237, %v238
        %v246 = vmul.f32 %v245, 0.5
        %v247 = vmul.f32 %v244, 0.5
        %v248 = vsub.f32 %v246, %v247
        %v249 = vadd.f32 %v248, %v244
        %v250 = vld [vmem:[%s159] sm:$0x7f]
        %v251 = vld [vmem:[%s159 + $0x8] sm:$0x7f]
        %v252 = vld [vmem:[%s159 + $0x10] sm:$0x7f]
        %v253 = vld [vmem:[%s159 + $0x18] sm:$0x7f]
        %v254 = vld [vmem:[%s159 + $0x20] sm:$0x7f]
        %v255 = vld [vmem:[%s159 + $0x28] sm:$0x7f]
        %v256 = vld [vmem:[%s159 + $0x30] sm:$0x7f]
        %v257 = vld [vmem:[%s159 + $0x38] sm:$0x7f]
        %259 = vset.pattern.permute.xlu0 0
        %260 = vperm.xlu0 %259, %v248
        %v261 = vpop.permute.xlu0 %260
        %vm263 = vcmp.gt.f32.partialorder %v250, %v261
        %vm264 = vcmp.gt.f32.partialorder %v251, %v261
        %vm265 = vcmp.gt.f32.partialorder %v252, %v261
        %vm266 = vcmp.gt.f32.partialorder %v253, %v261
        %vm267 = vcmp.gt.f32.partialorder %v254, %v261
        %vm268 = vcmp.gt.f32.partialorder %v255, %v261
        %vm269 = vcmp.gt.f32.partialorder %v256, %v261
        %vm270 = vcmp.gt.f32.partialorder %v257, %v261
        %272 = vset.pattern.permute.xlu0 0
        %273 = vperm.xlu0 %272, %v249
        %v274 = vpop.permute.xlu0 %273
        %vm276 = vcmp.lt.f32.partialorder %v250, %v274
        %vm277 = vcmp.lt.f32.partialorder %v251, %v274
        %vm278 = vcmp.lt.f32.partialorder %v252, %v274
        %vm279 = vcmp.lt.f32.partialorder %v253, %v274
        %vm280 = vcmp.lt.f32.partialorder %v254, %v274
        %vm281 = vcmp.lt.f32.partialorder %v255, %v274
        %vm282 = vcmp.lt.f32.partialorder %v256, %v274
        %vm283 = vcmp.lt.f32.partialorder %v257, %v274
        %vm284 = vmand %vm263, %vm276
        %vm285 = vmand %vm264, %vm277
        %vm286 = vmand %vm265, %vm278
        %vm287 = vmand %vm266, %vm279
        %vm288 = vmand %vm267, %vm280
        %vm289 = vmand %vm268, %vm281
        %vm290 = vmand %vm269, %vm282
        %vm291 = vmand %vm270, %vm283
        %v292 = vsel %vm284, 1, 0
        %v293 = vsel %vm285, 1, 0
        %v294 = vsel %vm286, 1, 0
        %v295 = vsel %vm287, 1, 0
        %v296 = vsel %vm288, 1, 0
        %v297 = vsel %vm289, 1, 0
        %v298 = vsel %vm290, 1, 0
        %v299 = vsel %vm291, 1, 0
        %v300 = vrot.slane %v292, 1
        %v301 = vrot.slane %v293, 1
        %v302 = vrot.slane %v294, 1
        %v303 = vrot.slane %v295, 1
        %v304 = vrot.slane %v296, 1
        %v305 = vrot.slane %v297, 1
        %v306 = vrot.slane %v298, 1
        %v307 = vrot.slane %v299, 1
        %vm308 = vcmp.ne.s32.totalorder %v300, 0
        %vm309 = vcmp.ne.s32.totalorder %v301, 0
        %vm310 = vcmp.ne.s32.totalorder %v302, 0
        %vm311 = vcmp.ne.s32.totalorder %v303, 0
        %vm312 = vcmp.ne.s32.totalorder %v304, 0
        %vm313 = vcmp.ne.s32.totalorder %v305, 0
        %vm314 = vcmp.ne.s32.totalorder %v306, 0
        %vm315 = vcmp.ne.s32.totalorder %v307, 0
        %vm316 = vmand %vm284, %vm308
        %vm317 = vmand %vm285, %vm309
        %vm318 = vmand %vm286, %vm310
        %vm319 = vmand %vm287, %vm311
        %vm320 = vmand %vm288, %vm312
        %vm321 = vmand %vm289, %vm313
        %vm322 = vmand %vm290, %vm314
        %vm323 = vmand %vm291, %vm315
        %v324 = vsel %vm316, 1, 0
        %v325 = vsel %vm317, 1, 0
        %v326 = vsel %vm318, 1, 0
        %v327 = vsel %vm319, 1, 0
        %v328 = vsel %vm320, 1, 0
        %v329 = vsel %vm321, 1, 0
        %v330 = vsel %vm322, 1, 0
        %v331 = vsel %vm323, 1, 0
        %v332 = vperm.slane %v324, 0
        %v333 = vperm.slane %v325, 0
        %v334 = vperm.slane %v326, 0
        %v335 = vperm.slane %v327, 0
        %v336 = vperm.slane %v328, 0
        %v337 = vperm.slane %v329, 0
        %v338 = vperm.slane %v330, 0
        %v339 = vperm.slane %v331, 0
        %vm340 = vcmp.eq.s32.totalorder %v332, 1
        %vm341 = vcmp.eq.s32.totalorder %v333, 1
        %vm342 = vcmp.eq.s32.totalorder %v334, 1
        %vm343 = vcmp.eq.s32.totalorder %v335, 1
        %vm344 = vcmp.eq.s32.totalorder %v336, 1
        %vm345 = vcmp.eq.s32.totalorder %v337, 1
        %vm346 = vcmp.eq.s32.totalorder %v338, 1
        %vm347 = vcmp.eq.s32.totalorder %v339, 1
        %v348 = vsel %vm340, nan, %v250
        %v349 = vsel %vm341, nan, %v251
        %v350 = vsel %vm342, nan, %v252
        %v351 = vsel %vm343, nan, %v253
        %v352 = vsel %vm344, nan, %v254
        %v353 = vsel %vm345, nan, %v255
        %v354 = vsel %vm346, nan, %v256
        %v355 = vsel %vm347, nan, %v257
        %356 = vst [vmem:[%s167] sm:$0x7f] %v348
        %357 = vst [vmem:[%s167 + $0x8] sm:$0x7f] %v349
        %358 = vst [vmem:[%s167 + $0x10] sm:$0x7f] %v350
        %359 = vst [vmem:[%s167 + $0x18] sm:$0x7f] %v351
        %360 = vst [vmem:[%s167 + $0x20] sm:$0x7f] %v352
        %361 = vst [vmem:[%s167 + $0x28] sm:$0x7f] %v353
        %362 = vst [vmem:[%s167 + $0x30] sm:$0x7f] %v354
        %363 = vst [vmem:[%s167 + $0x38] sm:$0x7f] %v355
      $region40: #{a_call__.1} parent=27 // pred_fallthru
        _
      %p364 = scmp.eq.s32.totalorder %s19, 0
      %s365 = scalar_select %p364, 0, %s20
      %s366 = smul.u32 8, %s365
      %p367 = scmp.lt.s32.totalorder %s366, 7
      %s368 = scalar_select %p367, %s366, 7
      %s369 = smul.addr %s368, 8
      %s370 = scalar_lea.vmem %s2, %s369
      // Predicated region
      $region41: #{a_call__.1} parent=27 // pred_check
        %p371 = pneg %p96
      $region42: #{a_call__.1} parent=27 // pred_check_branch
        %373 = sbr.rel (%p371) target = $region44
      $region43: #{a_call__.1} parent=27 // pred_region
        %p374 = scmp.eq.s32.totalorder %s19, 0
        %s375 = scalar_select %p374, 0, %s20
        %s376 = smul.u32 8, %s375
      $region44: #{a_call__.1} parent=27 // pred_fallthru
        _
    $region28: #{a_call__.1} parent=5 // pred_fallthru
      _
    %p377 = scmp.le.s32.totalorder 2, %s10
    // Predicated region
    $region45: #{a_call__.1} parent=5 // pred_check
      %p378 = pneg %p377
    $region46: #{a_call__.1} parent=5 // pred_check_branch
      %380 = sbr.rel (%p378) target = $region48
    $region47: #{a_call__.1} parent=5 // pred_region
      %s381 = ssub.s32 %s10, 2
      // Predicated region
      $region49: #{a_call__.1} parent=47 // pred_check
        %p382 = pneg %p102
      $region50: #{a_call__.1} parent=47 // pred_check_branch
        %384 = sbr.rel (%p382) target = $region52
      $region51: #{a_call__.1} parent=47 // pred_region
        %p385 = scmp.eq.s32.totalorder %s21, 0
        %s386 = scalar_select %p385, 0, %s22
        %s387 = smul.u32 8, %s386
        %p388 = scmp.lt.s32.totalorder %s387, 7
        %s389 = scalar_select %p388, %s387, 7
        %s390 = smul.addr %s389, 8
        %s391 = scalar_lea.vmem %s2, %s390
      $region52: #{a_call__.1} parent=47 // pred_fallthru
        _
    $region48: #{a_call__.1} parent=5 // pred_fallthru
      _
  $region6: #{a_call__.1} parent=0 // loop_footer
    %s14 = sadd.s32 1, %s10
  $region7: #{a_call__.1} parent=0 // loop_footer_branch
    %9 = sbr.rel target = $region3
  $region8: #{a_call__.1} parent=0 // loop_exit
    _

</llo_original>
